<compile_context>
chip_gen: v7x
topology: tpu7x:2x2x1
jax: 0.10.0
libtpu: 0.0.40
codegen_flags: <defaults>
</compile_context>

<pallas_src>
import jax
import jax.numpy as jnp
from jax.experimental import pallas as pl
from jax.experimental.pallas import tpu as pltpu

EPS = 1e-6


def _layernorm_rows_kernel(alpha_ref, bias_ref, x_ref, o_ref):
    """LayerNorm over the last dim of a (TILE_ROWS, D) tile.

    alpha_ref / bias_ref: (1,) scalars in SMEM.
    x_ref / o_ref:        (TILE_ROWS, D) VMEM tiles in the I/O dtype.
    """
    x = x_ref[...].astype(jnp.float32)
    d = x.shape[-1]

    # Fused single-pass reduction: sum(x) and sum(x*x) reuse the loaded vregs.
    s1 = jnp.sum(x, axis=-1, keepdims=True)
    s2 = jnp.sum(x * x, axis=-1, keepdims=True)
    mean = s1 * jnp.float32(1.0 / d)
    # Unbiased variance (matches torch.Tensor.std(dim=-1)):
    #   (sum(x^2) - D*mean^2) / (D - 1)
    var = (s2 - s1 * mean) * jnp.float32(1.0 / (d - 1))
    var = jnp.maximum(var, jnp.float32(0.0))          # guard tiny negative roundoff
    std = jnp.sqrt(var)

    # Per-row reciprocal: `rows` ops instead of rows*D broadcast divides.
    # approx=False keeps bit-closeness to the pure-JAX reference.
    inv = pl.reciprocal(std + jnp.float32(EPS), approx=False)

    alpha = alpha_ref[0].astype(jnp.float32)
    bias = bias_ref[0].astype(jnp.float32)
    scale = alpha * inv                                # (rows, 1)
    o_ref[...] = ((x - mean) * scale + bias).astype(o_ref.dtype)


def _pick_tile_rows(n_rows, d, itemsize, target_rows=512, tile_budget_bytes=4 << 20):
    """Largest row tile <= target that keeps one tile under the byte budget.

    One ~4 MiB I/O tile => double-buffered in+out plus in-kernel f32 temporaries
    stays well under v7x's 64 MiB VMEM and v5e's 16 MiB default scoped limit.
    """
    max_rows = max(8, tile_budget_bytes // max(1, d * itemsize))
    tile = min(target_rows, max_rows)
    tile -= tile % 8                       # sublane-aligned
    tile = max(tile, 8)
    if n_rows <= tile:
        return n_rows                      # full-extent block: always legal
    return tile                            # multiple of 8; ragged tail handled by Pallas


def encoder_forward(x, mask, alpha, bias, layers=()):
    """Pallas implementation of Encoder.forward.

    x:      (..., D) activations (e.g. (B, S, D))
    mask:   consumed only by the (empty) layer stack
    alpha:  (1,) scale parameter
    bias:   (1,) shift parameter
    layers: sequence of callables layer(x, mask) -> x  (empty here)
    """
    for layer in layers:                   # identity stack in this synthetic setup
        x = layer(x, mask)

    orig_shape = x.shape
    d = orig_shape[-1]
    assert d > 1, "LayerNormalization needs D > 1 (unbiased std divides by D-1)"

    rows = 1
    for s in orig_shape[:-1]:
        rows *= s

    # Keep HBM traffic in the input dtype; no wrapper-side upcast.
    x2 = x.reshape(rows, d)
    itemsize = x2.dtype.itemsize
    tile_rows = _pick_tile_rows(rows, d, itemsize)
    grid = (pl.cdiv(rows, tile_rows),)

    # TODO(synk): for D < 128 (as in the demo shape) the output stores are
    # lane-masked; a lane-dense repack (viewing rows as 128-wide slabs) would
    # need an in-kernel segmented reduction and is omitted here.

    cost = pl.CostEstimate(
        flops=8 * rows * d,
        transcendentals=2 * rows,
        bytes_accessed=2 * rows * d * itemsize,
    )

    out = pl.pallas_call(
        _layernorm_rows_kernel,
        out_shape=jax.ShapeDtypeStruct((rows, d), x2.dtype),
        grid_spec=pltpu.PrefetchScalarGridSpec(
            num_scalar_prefetch=0,
            grid=grid,
            in_specs=[
                pl.BlockSpec(memory_space=pltpu.SMEM),              # alpha (1,)
                pl.BlockSpec(memory_space=pltpu.SMEM),              # bias  (1,)
                pl.BlockSpec((tile_rows, d), lambda r: (r, 0)),     # x row tile
            ],
            out_specs=pl.BlockSpec((tile_rows, d), lambda r: (r, 0)),
        ),
        compiler_params=pltpu.CompilerParams(
            dimension_semantics=("parallel",),
            vmem_limit_bytes=32 * 1024 * 1024,
        ),
        cost_estimate=cost,
    )(alpha, bias, x2)

    return out.reshape(orig_shape)


def encoder_reference(x, mask, alpha, bias):
    """Pure-JAX reference mirroring the PyTorch semantics."""
    xf = x.astype(jnp.float32)
    mean = jnp.mean(xf, axis=-1, keepdims=True)
    diff = xf - mean
    var = jnp.sum(diff * diff, axis=-1, keepdims=True) / (x.shape[-1] - 1)
    std = jnp.sqrt(var)
    return (alpha[0] * diff / (std + EPS) + bias[0]).astype(x.dtype)


if __name__ == "__main__":
    key = jax.random.PRNGKey(0)
    B, S, D = 2, 8, 32

    kx, km = jax.random.split(key)
    x = jax.random.normal(kx, (B, S, D), dtype=jnp.float32)
    # mask: (B, 1, S, S) attention mask, unused by the (empty) layer stack.
    mask = (jax.random.uniform(km, (B, 1, S, S)) > 0.1).astype(jnp.float32)

    # Deterministic parameters, matching nn.Parameter(torch.ones(1)/zeros(1)).
    alpha = jnp.ones((1,), dtype=jnp.float32)
    bias = jnp.zeros((1,), dtype=jnp.float32)

    out = encoder_forward(x, mask, alpha, bias)
    out = jax.block_until_ready(out)

    ref = encoder_reference(x, mask, alpha, bias)
    assert out.shape == (B, S, D)
    assert jnp.allclose(out, ref, atol=1e-5, rtol=1e-5), "mismatch vs reference"

    print("KERNEL_OK")
</pallas_src>

<mosaic_0001>
module attributes {stable_mosaic.version = 11 : i64} {
  func.func @_layernorm_rows_kernel(%arg0: i32, %arg1: memref<1xf32, #tpu.memory_space<smem>>, %arg2: memref<1xf32, #tpu.memory_space<smem>>, %arg3: memref<16x32xf32, #tpu.memory_space<vmem>>, %arg4: memref<16x32xf32, #tpu.memory_space<vmem>>) attributes {dimension_semantics = [#tpu.dimension_semantics<parallel>], iteration_bounds = array<i64: 1>, scalar_prefetch = 0 : i64, scratch_operands = 0 : i64, tpu.core_type = #tpu.core_type<tc>, window_params = [{transform_indices = @transform_0, window_bounds = array<i64: 1>}, {transform_indices = @transform_1, window_bounds = array<i64: 1>}, {transform_indices = @transform_2, window_bounds = array<i64: 16, 32>}, {transform_indices = @transform_3, window_bounds = array<i64: 16, 32>}]} {
    %c0 = arith.constant 0 : index
    %c0_0 = arith.constant 0 : index
    %0 = vector.load %arg3[%c0, %c0_0] : memref<16x32xf32, #tpu.memory_space<vmem>>, vector<16x32xf32>
    %cst = arith.constant dense<0.000000e+00> : vector<16xf32>
    %1 = vector.multi_reduction <add>, %0, %cst [1] : vector<16x32xf32> to vector<16xf32>
    %2 = vector.shape_cast %1 : vector<16xf32> to vector<16x1xf32>
    %3 = arith.mulf %0, %0 : vector<16x32xf32>
    %cst_1 = arith.constant dense<0.000000e+00> : vector<16xf32>
    %4 = vector.multi_reduction <add>, %3, %cst_1 [1] : vector<16x32xf32> to vector<16xf32>
    %5 = vector.shape_cast %4 : vector<16xf32> to vector<16x1xf32>
    %cst_2 = arith.constant 3.125000e-02 : f32
    %6 = vector.broadcast %cst_2 : f32 to vector<16x1xf32>
    %7 = arith.mulf %2, %6 : vector<16x1xf32>
    %8 = arith.mulf %2, %7 : vector<16x1xf32>
    %9 = arith.subf %5, %8 : vector<16x1xf32>
    %cst_3 = arith.constant 0.0322580636 : f32
    %10 = vector.broadcast %cst_3 : f32 to vector<16x1xf32>
    %11 = arith.mulf %9, %10 : vector<16x1xf32>
    %cst_4 = arith.constant 0.000000e+00 : f32
    %12 = vector.broadcast %cst_4 : f32 to vector<16x1xf32>
    %13 = arith.maximumf %11, %12 : vector<16x1xf32>
    %14 = math.sqrt %13 : vector<16x1xf32>
    %cst_5 = arith.constant 9.99999997E-7 : f32
    %15 = vector.broadcast %cst_5 : f32 to vector<16x1xf32>
    %16 = arith.addf %14, %15 : vector<16x1xf32>
    %17 = tpu.reciprocal %16 : vector<16x1xf32> -> vector<16x1xf32>
    %c0_6 = arith.constant 0 : index
    %18 = memref.load %arg1[%c0_6] : memref<1xf32, #tpu.memory_space<smem>>
    %c0_7 = arith.constant 0 : index
    %19 = memref.load %arg2[%c0_7] : memref<1xf32, #tpu.memory_space<smem>>
    %20 = vector.broadcast %18 : f32 to vector<16x1xf32>
    %21 = arith.mulf %20, %17 : vector<16x1xf32>
    %22 = vector.broadcast %7 : vector<16x1xf32> to vector<16x32xf32>
    %23 = arith.subf %0, %22 : vector<16x32xf32>
    %24 = vector.broadcast %21 : vector<16x1xf32> to vector<16x32xf32>
    %25 = arith.mulf %23, %24 : vector<16x32xf32>
    %26 = vector.broadcast %19 : f32 to vector<16x32xf32>
    %27 = arith.addf %25, %26 : vector<16x32xf32>
    %c0_8 = arith.constant 0 : index
    %c0_9 = arith.constant 0 : index
    %28 = vector.load %arg4[%c0_8, %c0_9] : memref<16x32xf32, #tpu.memory_space<vmem>>, vector<16x32xf32>
    tpu.vector_store %arg4[%c0_8, %c0_9], %27 {strides = array<i32>} : memref<16x32xf32, #tpu.memory_space<vmem>>, vector<16x32xf32>,
    return
  }
  func.func @transform_0(%arg0: i32) -> i32 {
    %c0_i32 = arith.constant 0 : i32
    %c0_i32_0 = arith.constant 0 : i32
    return %c0_i32 : i32
  }
  func.func @transform_1(%arg0: i32) -> i32 {
    %c0_i32 = arith.constant 0 : i32
    %c0_i32_0 = arith.constant 0 : i32
    return %c0_i32 : i32
  }
  func.func @transform_2(%arg0: i32) -> (i32, i32) {
    %c0_i32 = arith.constant 0 : i32
    %c0_i32_0 = arith.constant 0 : i32
    return %arg0, %c0_i32 : i32, i32
  }
  func.func @transform_3(%arg0: i32) -> (i32, i32) {
    %c0_i32 = arith.constant 0 : i32
    %c0_i32_0 = arith.constant 0 : i32
    return %arg0, %c0_i32 : i32, i32
  }
}

</mosaic_0001>

<llo_original>
// kernel: tpu_custom_call.1
$region0: #{tpu_custom_call.1}
  #allocation0 [shape = 'u32[]', space=smem, size = 0x4, offset = 0x4, fixed_abs, tag = 'smem constant byte address 0x4 - core index']
  #allocation1 [shape = 'u32[144,128]{1,0:T(1,128)}', space=vmem, size = 0x12000, scoped, tag = 'internal scratch']
  #allocation2 [shape = 'f32[1]{0:T(128)S(6)}', space=smem, size = 0x200, scoped, tag = 'scoped memory for tpu_custom_call.1']
  #allocation3 [shape = 'f32[1]{0:T(128)S(6)}', space=smem, size = 0x200, scoped, tag = 'scoped memory for tpu_custom_call.1']
  %s0 = inlined_call_operand.<no memory space> [shape: f32[1], index: 0, kind: input, shape index: {}]
  %s1 = inlined_call_operand.<no memory space> [shape: f32[1], index: 1, kind: input, shape index: {}]
  %s2 = inlined_call_operand.hbm [shape: f32[16,32], index: 2, kind: input, shape index: {}]
  %s3 = inlined_call_operand.hbm [shape: f32[16,32], index: 3, kind: output, shape index: {}]
  %s4 = sld [smem:[#allocation0]]
  $region26: #{tpu_custom_call.1} parent=0
    _
  %s6 = ssub.s32 1, %s4
  %s7 = scalar_select 0, %s6, %s4
  %8 = sst [smem:[#allocation2]] %s0
  %9 = sst [smem:[#allocation3]] %s1
  $region1: #{tpu_custom_call.1} parent=0
    #allocation4 [shape = 'u8[8192]{0}', space=vmem, size = 0x2000, scoped, tag = 'input window, operand 2, single buffered']
    #allocation5 [shape = 's32[1]{0}', space=sflag, size = 0x4, scoped, tag = 'scoped memory for tpu_custom_call.1']
    #allocation6 [shape = 's32[1]{0}', space=sflag, size = 0x4, scoped, tag = 'scoped memory for tpu_custom_call.1']
    #allocation7 [shape = 'u8[8192]{0}', space=vmem, size = 0x2000, scoped, tag = 'output window, operand 0, single buffered']
    %10 = vsyncpa [#allocation5], 0
    %11 = vsyncpa [#allocation6], 0
    // Predicated region
    $region2: #{tpu_custom_call.1} parent=1 // pred_check
      _
    $region3: #{tpu_custom_call.1} parent=1 // pred_check_branch
      %13 = sbr.rel (0) target = $region5
    $region4: #{tpu_custom_call.1} parent=1 // pred_region
      _
    $region5: #{tpu_custom_call.1} parent=1 // pred_fallthru
      _
    // Predicated region
    $region6: #{tpu_custom_call.1} parent=1 // pred_check
      _
    $region7: #{tpu_custom_call.1} parent=1 // pred_check_branch
      %15 = sbr.rel (0) target = $region9
    $region8: #{tpu_custom_call.1} parent=1 // pred_region
      _
    $region9: #{tpu_custom_call.1} parent=1 // pred_fallthru
      _
    // Predicated region
    $region10: #{tpu_custom_call.1} parent=1 // pred_check
      _
    $region11: #{tpu_custom_call.1} parent=1 // pred_check_branch
      %17 = sbr.rel (0) target = $region13
    $region12: #{tpu_custom_call.1} parent=1 // pred_region
      %s19 = ssub.s32 256, 256
      %20 = vsyncadd [#allocation5], %s19
      %s21 = sshll.u32 [#allocation4], 4
      %s22 = int_to_ptr.vmem [resolvable:$true] %s21
      %27 = dma.hbm_to_vmem [thread:$0]  %s2, 256, %s22, [#allocation5], 128, 128, 8
    $region13: #{tpu_custom_call.1} parent=1 // pred_fallthru
      _
    // Predicated region
    $region14: #{tpu_custom_call.1} parent=1 // pred_check
      _
    $region15: #{tpu_custom_call.1} parent=1 // pred_check_branch
      %29 = sbr.rel (0) target = $region17
    $region16: #{tpu_custom_call.1} parent=1 // pred_region
      %30 = dma.done [#allocation5], 256
    $region17: #{tpu_custom_call.1} parent=1 // pred_fallthru
      _
    %v31 = vld [vmem:[#allocation4] sm:$0xff]
    %v32 = vld [vmem:[#allocation4 + $0x8] sm:$0xff]
    %vm33 = vcmask 261120
    %v34 = vsel %vm33, %v31, 0.0
    %35 = vadd.xlane.f32.xlu0 %v34
    %v36 = vpop.xlane.xlu0 %35
    %v37 = vsel %vm33, %v32, 0.0
    %38 = vadd.xlane.f32.xlu0 %v37
    %v39 = vpop.xlane.xlu0 %38
    %v40 = vmul.f32 %v31, %v31
    %v41 = vmul.f32 %v32, %v32
    %v42 = vsel %vm33, %v40, 0.0
    %43 = vadd.xlane.f32.xlu0 %v42
    %v44 = vpop.xlane.xlu0 %43
    %v45 = vsel %vm33, %v41, 0.0
    %46 = vadd.xlane.f32.xlu0 %v45
    %v47 = vpop.xlane.xlu0 %46
    %v48 = vmul.f32 %v36, 0.03125
    %v49 = vmul.f32 %v39, 0.03125
    %v50 = vmul.f32 %v36, %v48
    %v51 = vmul.f32 %v39, %v49
    %v52 = vsub.f32 %v44, %v50
    %v53 = vsub.f32 %v47, %v51
    %v54 = vmul.f32 %v52, 0.032258064
    %v55 = vmul.f32 %v53, 0.032258064
    %v56 = vmax.f32 %v54, 0.0
    %v57 = vmax.f32 %v55, 0.0
    %v58 = vrsqrt.pop %v56
    %v59 = vmul.f32 %v56, %v58
    %vm60 = vcmp.eq.f32.partialorder %v56, inf
    %v61 = vsel %vm60, %v56, %v59
    %vm62 = vcmp.eq.f32.partialorder %v56, 0.0
    %v63 = vand.u32 %v56, 2147483648
    %v64 = vsel %vm62, %v63, %v61
    %v65 = vrsqrt.pop %v57
    %v66 = vmul.f32 %v57, %v65
    %vm67 = vcmp.eq.f32.partialorder %v57, inf
    %v68 = vsel %vm67, %v57, %v66
    %vm69 = vcmp.eq.f32.partialorder %v57, 0.0
    %v70 = vand.u32 %v57, 2147483648
    %v71 = vsel %vm69, %v70, %v68
    %v72 = vadd.f32 %v64, 1e-06
    %v73 = vadd.f32 %v71, 1e-06
    %v74 = vrcp.pop %v72
    %v75 = vrcp.pop %v73
    %s76 = sld [smem:[#allocation2]]
    %s77 = sld [smem:[#allocation3]]
    %v78 = vstv %s76
    %v79 = vmul.f32 %v78, %v74
    %v80 = vmul.f32 %v78, %v75
    %v81 = vsub.f32 %v31, %v48
    %v82 = vsub.f32 %v32, %v49
    %v83 = vmul.f32 %v81, %v79
    %v84 = vmul.f32 %v82, %v80
    %v85 = vstv %s77
    %v86 = vadd.f32 %v83, %v85
    %v87 = vadd.f32 %v84, %v85
    %88 = vst.msk [vmem:[#allocation7] sm:$0xff] %vm33, %v86
    %89 = vst.msk [vmem:[#allocation7 + $0x8] sm:$0xff] %vm33, %v87
    // Predicated region
    $region18: #{tpu_custom_call.1} parent=1 // pred_check
      _
    $region19: #{tpu_custom_call.1} parent=1 // pred_check_branch
      %91 = sbr.rel (0) target = $region21
    $region20: #{tpu_custom_call.1} parent=1 // pred_region
      %s93 = ssub.s32 256, 256
      %94 = vsyncadd [#allocation6], %s93
      %s95 = sshll.u32 [#allocation7], 4
      %s96 = int_to_ptr.vmem [resolvable:$true] %s95
      %101 = dma.vmem_to_hbm [thread:$0]  %s96, 256, %s3, [#allocation6], 128, 128, 8
    $region21: #{tpu_custom_call.1} parent=1 // pred_fallthru
      _
    // Predicated region
    $region22: #{tpu_custom_call.1} parent=1 // pred_check
      _
    $region23: #{tpu_custom_call.1} parent=1 // pred_check_branch
      %103 = sbr.rel (0) target = $region25
    $region24: #{tpu_custom_call.1} parent=1 // pred_region
      %104 = dma.done [#allocation6], 256
    $region25: #{tpu_custom_call.1} parent=1 // pred_fallthru
      _
    %105 = vsyncpa [#allocation5], 1
    %106 = vsyncpa [#allocation6], 1

</llo_original>
